<compile_context>
chip_gen: v5e
topology: v5e:2x2
jax: 0.10.0
libtpu: 0.0.40
codegen_flags: <defaults>
</compile_context>

<pallas_src>
import math
from functools import partial

import jax
import jax.numpy as jnp
from jax.experimental import pallas as pl
from jax.experimental.pallas import tpu as pltpu


def _attention_kernel(q_ref, kv_ref, wb_ref, out_ref, *, E, N, LN, SN):
    """Fused single-head attention; whole problem in one un-gridded invocation.

    q_ref:   (LN, E)     queries, row r = l*N + n (row-major collapse of (L, N, E))
    kv_ref:  (SN, E)     keys == values, row r = s*N + n
    wb_ref:  (E+1, 4E)   rows 0:E = [Wo^T | Wq^T*scale | Wk^T | Wv^T]
                         row  E   = [bo   | bq*scale   | bk   | bv  ]
    out_ref: (LN, E)     output, same row order as q_ref
    """
    wb = wb_ref[...]                        # (E+1, 4E) single load
    w = wb[0:E, :]                          # (E, 4E)   sublane-aligned weight slab
    b = wb[E:E + 1, :]                      # (1, 4E)   fused bias row

    # Stack queries and keys/values along sublanes (16+16 rows, 8-aligned) and do
    # ONE lane-dense (32,32)@(32,128) MXU matmul against the full slab; slice
    # q/k/v out of the f32 result (cheap), keeping MXU operands lane-aligned.
    x = jnp.concatenate([q_ref[...], kv_ref[...]], axis=0)          # (LN+SN, E)
    r = jnp.dot(x, w, preferred_element_type=jnp.float32) + b       # (LN+SN, 4E)
    q = r[0:LN, E:2 * E]                    # (LN, E)  scale already folded in
    k = r[LN:LN + SN, 2 * E:3 * E]          # (SN, E)
    v = r[LN:LN + SN, 3 * E:4 * E]          # (SN, E)

    # All-pairs scores (contract last dims -> no in-kernel transpose).
    scores = jax.lax.dot_general(q, k, (((1,), (1,)), ((), ())),
                                 preferred_element_type=jnp.float32)  # (LN, SN)

    # Cross-batch mask generated in-kernel (no mask DMA): row/col batch ids from
    # 2D iotas, mismatching pairs forced to -1e30 (underflow to exact 0 in exp).
    row_b = jax.lax.broadcasted_iota(jnp.int32, (LN, SN), 0) % N
    col_b = jax.lax.broadcasted_iota(jnp.int32, (LN, SN), 1) % N
    scores = jnp.where(row_b == col_b, scores, -1e30)

    # Numerically stable softmax over keys — exact divide (accuracy is free here).
    m = jnp.max(scores, axis=-1, keepdims=True)
    p = jnp.exp(scores - m)
    attn = p / jnp.sum(p, axis=-1, keepdims=True)                    # (LN, SN)

    ctx = jnp.dot(attn, v, preferred_element_type=jnp.float32)       # (LN, E)

    # Output projection: Wo^T sits in the lane-ALIGNED first E columns of the slab.
    out = jnp.dot(ctx, w[:, 0:E], preferred_element_type=jnp.float32) + b[:, 0:E]
    out_ref[...] = out.astype(out_ref.dtype)


def fuse_params(params, embed_dim):
    """Build the fused (E+1, 4E) weight+bias slab ONCE (init/load time, not per call).

    Column order [Wo^T | Wq^T*scale | Wk^T | Wv^T] keeps the output-projection
    operand lane-aligned; the 1/sqrt(E) scale is folded into Wq and bq (matching
    PyTorch's post-projection query scaling).
    """
    E = embed_dim
    scale = 1.0 / math.sqrt(E)
    w = jnp.concatenate(
        [params["wo"].T, params["wq"].T * scale, params["wk"].T, params["wv"].T],
        axis=1).astype(jnp.float32)                                   # (E, 4E)
    b = jnp.concatenate(
        [params["bo"], params["bq"] * scale, params["bk"], params["bv"]]
    ).reshape(1, 4 * E).astype(jnp.float32)                           # (1, 4E)
    return jnp.concatenate([w, b], axis=0)                            # (E+1, 4E)


def scaled_product_attention(z_feat, z_feat_projection, wb_slab):
    """Forward pass matching ScaledProductAttention.forward (eval mode).

    z_feat:            (L, N, E)  query
    z_feat_projection: (S, N, E)  key and value
    wb_slab:           (E+1, 4E)  pre-fused weights+biases (see fuse_params)
    returns:           (L, N, E)
    """
    L, N, E = z_feat.shape
    S = z_feat_projection.shape[0]
    LN, SN = L * N, S * N

    # Row-major collapse (L, N, E) -> (L*N, E): free, no transpose, no HBM round trip.
    q2 = z_feat.reshape(LN, E)
    kv2 = z_feat_projection.reshape(SN, E)

    kernel = partial(_attention_kernel, E=E, N=N, LN=LN, SN=SN)

    out2 = pl.pallas_call(
        kernel,
        out_shape=jax.ShapeDtypeStruct((LN, E), z_feat.dtype),
        # No grid: whole-array operands resident in VMEM, no pipeline scaffolding,
        # no double-buffering — this problem is ~25 KB total.
        in_specs=[
            pl.BlockSpec(memory_space=pltpu.MemorySpace.VMEM),   # q  (16, 32)
            pl.BlockSpec(memory_space=pltpu.MemorySpace.VMEM),   # kv (16, 32)
            pl.BlockSpec(memory_space=pltpu.MemorySpace.VMEM),   # fused slab (33, 128)
        ],
        out_specs=pl.BlockSpec(memory_space=pltpu.MemorySpace.VMEM),
    )(q2, kv2, wb_slab)

    return out2.reshape(L, N, E)    # free reshape back to (L, N, E)


def init_params(key, embed_dim):
    """Deterministic parameter init mirroring nn.MultiheadAttention shapes.

    in_proj_weight: (3E, E) split into wq/wk/wv, xavier_uniform-like.
    in_proj_bias:   (3E,)   zeros.
    out_proj:       Linear(E, E) weight (E, E), bias (E,).
    """
    k1, k2, k3, k4 = jax.random.split(key, 4)
    E = embed_dim
    bound_in = math.sqrt(6.0 / (E + E))          # xavier_uniform fan_in=fan_out=E
    wq = jax.random.uniform(k1, (E, E), jnp.float32, -bound_in, bound_in)
    wk = jax.random.uniform(k2, (E, E), jnp.float32, -bound_in, bound_in)
    wv = jax.random.uniform(k3, (E, E), jnp.float32, -bound_in, bound_in)
    bound_out = 1.0 / math.sqrt(E)               # default Linear init bound
    wo = jax.random.uniform(k4, (E, E), jnp.float32, -bound_out, bound_out)
    return {
        "wq": wq, "wk": wk, "wv": wv,
        "bq": jnp.zeros((E,), jnp.float32),
        "bk": jnp.zeros((E,), jnp.float32),
        "bv": jnp.zeros((E,), jnp.float32),
        "wo": wo,
        "bo": jnp.zeros((E,), jnp.float32),
    }


def _reference(z_feat, z_feat_projection, params):
    """Pure-JAX reference of the same forward (for a sanity check)."""
    E = z_feat.shape[-1]
    q = z_feat @ params["wq"].T + params["bq"]
    k = z_feat_projection @ params["wk"].T + params["bk"]
    v = z_feat_projection @ params["wv"].T + params["bv"]
    # (L, N, E) x (S, N, E) -> (N, L, S)
    scores = jnp.einsum("lne,sne->nls", q, k) / math.sqrt(E)
    attn = jax.nn.softmax(scores, axis=-1)
    ctx = jnp.einsum("nls,sne->lne", attn, v)
    return ctx @ params["wo"].T + params["bo"]


if __name__ == "__main__":
    L, S, N, E = 8, 8, 2, 32        # seq_len_q, seq_len_kv, batch, embed_dim

    key = jax.random.PRNGKey(0)
    k_q, k_kv, k_p = jax.random.split(key, 3)
    z_feat = jax.random.normal(k_q, (L, N, E), jnp.float32)
    z_feat_projection = jax.random.normal(k_kv, (S, N, E), jnp.float32)
    params = init_params(k_p, E)

    # Fuse weights/biases ONCE (hoisted out of the per-call path per review).
    wb_slab = jax.block_until_ready(fuse_params(params, E))

    fwd = jax.jit(scaled_product_attention)
    out = fwd(z_feat, z_feat_projection, wb_slab)
    out = jax.block_until_ready(out)

    ref = _reference(z_feat, z_feat_projection, params)
    assert out.shape == (L, N, E)
    # Exact softmax divide restored -> tolerance tightened back from 2e-3.
    assert jnp.allclose(out, ref, atol=1e-3, rtol=1e-3), float(jnp.max(jnp.abs(out - ref)))

    print("KERNEL_OK")
</pallas_src>

<mosaic_0001>
module attributes {stable_mosaic.version = 11 : i64} {
  func.func @_attention_kernel(%arg0: memref<16x32xf32, #tpu.memory_space<vmem>>, %arg1: memref<16x32xf32, #tpu.memory_space<vmem>>, %arg2: memref<33x128xf32, #tpu.memory_space<vmem>>, %arg3: memref<16x32xf32, #tpu.memory_space<vmem>>) attributes {dimension_semantics = [], scalar_prefetch = 0 : i64, scratch_operands = 0 : i64, tpu.core_type = #tpu.core_type<tc>} {
    %c0 = arith.constant 0 : index
    %c0_0 = arith.constant 0 : index
    %0 = vector.load %arg2[%c0, %c0_0] : memref<33x128xf32, #tpu.memory_space<vmem>>, vector<33x128xf32>
    %1 = vector.extract_strided_slice %0 {offsets = [0, 0], sizes = [32, 128], strides = [1, 1]} : vector<33x128xf32> to vector<32x128xf32>
    %2 = vector.extract_strided_slice %0 {offsets = [32, 0], sizes = [1, 128], strides = [1, 1]} : vector<33x128xf32> to vector<1x128xf32>
    %c0_1 = arith.constant 0 : index
    %c0_2 = arith.constant 0 : index
    %3 = vector.load %arg0[%c0_1, %c0_2] : memref<16x32xf32, #tpu.memory_space<vmem>>, vector<16x32xf32>
    %c0_3 = arith.constant 0 : index
    %c0_4 = arith.constant 0 : index
    %4 = vector.load %arg1[%c0_3, %c0_4] : memref<16x32xf32, #tpu.memory_space<vmem>>, vector<16x32xf32>
    %5 = tpu.concatenate %3, %4 in 0 : vector<16x32xf32>, vector<16x32xf32> -> vector<32x32xf32>
    %cst = arith.constant dense<0.000000e+00> : vector<32x128xf32>
    %6 = tpu.matmul %5, %1, %cst {dimension_numbers = #tpu.dot_dimension_numbers<[1], [0], [0], [1], [0, 0, 1, 1], [], []>} : vector<32x32xf32>, vector<32x128xf32>, vector<32x128xf32> -> vector<32x128xf32>
    %7 = vector.broadcast %2 : vector<1x128xf32> to vector<32x128xf32>
    %8 = arith.addf %6, %7 : vector<32x128xf32>
    %9 = vector.extract_strided_slice %8 {offsets = [0, 32], sizes = [16, 32], strides = [1, 1]} : vector<32x128xf32> to vector<16x32xf32>
    %10 = vector.extract_strided_slice %8 {offsets = [16, 64], sizes = [16, 32], strides = [1, 1]} : vector<32x128xf32> to vector<16x32xf32>
    %11 = vector.extract_strided_slice %8 {offsets = [16, 96], sizes = [16, 32], strides = [1, 1]} : vector<32x128xf32> to vector<16x32xf32>
    %cst_5 = arith.constant dense<0.000000e+00> : vector<16x16xf32>
    %12 = tpu.matmul %9, %10, %cst_5 {dimension_numbers = #tpu.dot_dimension_numbers<[1], [1], [0], [0], [0, 0, 1, 0], [], []>} : vector<16x32xf32>, vector<16x32xf32>, vector<16x16xf32> -> vector<16x16xf32>
    %13 = tpu.iota {dimensions = array<i32: 0>} : vector<16x16xi32>
    %c2_i32 = arith.constant 2 : i32
    %c0_i32 = arith.constant 0 : i32
    %14 = arith.cmpi eq, %c2_i32, %c0_i32 : i32
    %c1_i32 = arith.constant 1 : i32
    %15 = arith.select %14, %c1_i32, %c2_i32 : i32
    %16 = vector.broadcast %15 : i32 to vector<16x16xi32>
    %17 = arith.remsi %13, %16 : vector<16x16xi32>
    %c0_i32_6 = arith.constant 0 : i32
    %18 = vector.broadcast %c0_i32_6 : i32 to vector<16x16xi32>
    %19 = arith.cmpi ne, %17, %18 : vector<16x16xi32>
    %c0_i32_7 = arith.constant 0 : i32
    %20 = vector.broadcast %c0_i32_7 : i32 to vector<16x16xi32>
    %21 = arith.cmpi slt, %17, %20 : vector<16x16xi32>
    %c0_i32_8 = arith.constant 0 : i32
    %22 = arith.cmpi slt, %15, %c0_i32_8 : i32
    %23 = vector.broadcast %22 : i1 to vector<16x16xi1>
    %24 = vector.broadcast %23 : vector<16x16xi1> to vector<16x16xi1>
    %25 = arith.xori %21, %24 : vector<16x16xi1>
    %26 = arith.andi %25, %19 : vector<16x16xi1>
    %27 = vector.broadcast %15 : i32 to vector<16x16xi32>
    %28 = arith.addi %17, %27 : vector<16x16xi32>
    %29 = arith.select %26, %28, %17 : vector<16x16xi1>, vector<16x16xi32>
    %30 = tpu.iota {dimensions = array<i32: 1>} : vector<16x16xi32>
    %c2_i32_9 = arith.constant 2 : i32
    %c0_i32_10 = arith.constant 0 : i32
    %31 = arith.cmpi eq, %c2_i32_9, %c0_i32_10 : i32
    %c1_i32_11 = arith.constant 1 : i32
    %32 = arith.select %31, %c1_i32_11, %c2_i32_9 : i32
    %33 = vector.broadcast %32 : i32 to vector<16x16xi32>
    %34 = arith.remsi %30, %33 : vector<16x16xi32>
    %c0_i32_12 = arith.constant 0 : i32
    %35 = vector.broadcast %c0_i32_12 : i32 to vector<16x16xi32>
    %36 = arith.cmpi ne, %34, %35 : vector<16x16xi32>
    %c0_i32_13 = arith.constant 0 : i32
    %37 = vector.broadcast %c0_i32_13 : i32 to vector<16x16xi32>
    %38 = arith.cmpi slt, %34, %37 : vector<16x16xi32>
    %c0_i32_14 = arith.constant 0 : i32
    %39 = arith.cmpi slt, %32, %c0_i32_14 : i32
    %40 = vector.broadcast %39 : i1 to vector<16x16xi1>
    %41 = vector.broadcast %40 : vector<16x16xi1> to vector<16x16xi1>
    %42 = arith.xori %38, %41 : vector<16x16xi1>
    %43 = arith.andi %42, %36 : vector<16x16xi1>
    %44 = vector.broadcast %32 : i32 to vector<16x16xi32>
    %45 = arith.addi %34, %44 : vector<16x16xi32>
    %46 = arith.select %43, %45, %34 : vector<16x16xi1>, vector<16x16xi32>
    %47 = arith.cmpi eq, %29, %46 : vector<16x16xi32>
    %cst_15 = arith.constant -1.000000e+30 : f32
    %48 = vector.broadcast %cst_15 : f32 to vector<16x16xf32>
    %49 = arith.select %47, %12, %48 : vector<16x16xi1>, vector<16x16xf32>
    %cst_16 = arith.constant dense<0xFF800000> : vector<16xf32>
    %50 = vector.multi_reduction <maximumf>, %49, %cst_16 [1] : vector<16x16xf32> to vector<16xf32>
    %51 = vector.shape_cast %50 : vector<16xf32> to vector<16x1xf32>
    %52 = vector.broadcast %51 : vector<16x1xf32> to vector<16x16xf32>
    %53 = arith.subf %49, %52 : vector<16x16xf32>
    %54 = math.exp %53 : vector<16x16xf32>
    %cst_17 = arith.constant dense<0.000000e+00> : vector<16xf32>
    %55 = vector.multi_reduction <add>, %54, %cst_17 [1] : vector<16x16xf32> to vector<16xf32>
    %56 = vector.shape_cast %55 : vector<16xf32> to vector<16x1xf32>
    %57 = vector.broadcast %56 : vector<16x1xf32> to vector<16x16xf32>
    %58 = arith.divf %54, %57 : vector<16x16xf32>
    %cst_18 = arith.constant dense<0.000000e+00> : vector<16x32xf32>
    %59 = tpu.matmul %58, %11, %cst_18 {dimension_numbers = #tpu.dot_dimension_numbers<[1], [0], [0], [1], [0, 0, 1, 1], [], []>} : vector<16x16xf32>, vector<16x32xf32>, vector<16x32xf32> -> vector<16x32xf32>
    %60 = vector.extract_strided_slice %1 {offsets = [0, 0], sizes = [32, 32], strides = [1, 1]} : vector<32x128xf32> to vector<32x32xf32>
    %cst_19 = arith.constant dense<0.000000e+00> : vector<16x32xf32>
    %61 = tpu.matmul %59, %60, %cst_19 {dimension_numbers = #tpu.dot_dimension_numbers<[1], [0], [0], [1], [0, 0, 1, 1], [], []>} : vector<16x32xf32>, vector<32x32xf32>, vector<16x32xf32> -> vector<16x32xf32>
    %62 = vector.extract_strided_slice %2 {offsets = [0, 0], sizes = [1, 32], strides = [1, 1]} : vector<1x128xf32> to vector<1x32xf32>
    %63 = vector.broadcast %62 : vector<1x32xf32> to vector<16x32xf32>
    %64 = arith.addf %61, %63 : vector<16x32xf32>
    %c0_20 = arith.constant 0 : index
    %c0_21 = arith.constant 0 : index
    %65 = vector.load %arg3[%c0_20, %c0_21] : memref<16x32xf32, #tpu.memory_space<vmem>>, vector<16x32xf32>
    tpu.vector_store %arg3[%c0_20, %c0_21], %64 {strides = array<i32>} : memref<16x32xf32, #tpu.memory_space<vmem>>, vector<16x32xf32>,
    return
  }
}

</mosaic_0001>

<llo_original>
// kernel: scaled_product_attention.1
$region0: #{scaled_product_attention.1}
  #allocation0 [shape = 'u32[]', space=smem, size = 0x4, offset = 0x4, fixed_abs, tag = 'smem constant byte address 0x4 - core index']
  #allocation1 [shape = 'u32[72,128]{1,0:T(1,128)}', space=vmem, size = 0x9000, scoped, tag = 'internal scratch']
  %s0 = inlined_call_operand.hbm [shape: f32[16,32], index: 0, kind: input, shape index: {}]
  %s1 = inlined_call_operand.hbm [shape: f32[16,32], index: 1, kind: input, shape index: {}]
  %s2 = inlined_call_operand.hbm [shape: f32[33,128], index: 2, kind: input, shape index: {}]
  %s3 = inlined_call_operand.hbm [shape: f32[16,32], index: 3, kind: output, shape index: {}]
  %s4 = sld [smem:[#allocation0]]
  $region34: #{scaled_product_attention.1} parent=0
    _
  %s6 = ssub.s32 1, %s4
  %s7 = scalar_select 0, %s6, %s4
  $region1: #{scaled_product_attention.1} parent=0
    #allocation2 [shape = 'u8[8192]{0}', space=vmem, size = 0x2000, scoped, tag = 'input window, operand 0, single buffered']
    #allocation3 [shape = 's32[1]{0}', space=sflag, size = 0x4, scoped, tag = 'scoped memory for scaled_product_attention.1']
    #allocation4 [shape = 's32[1]{0}', space=sflag, size = 0x4, scoped, tag = 'scoped memory for scaled_product_attention.1']
    #allocation5 [shape = 'u8[8192]{0}', space=vmem, size = 0x2000, scoped, tag = 'input window, operand 1, single buffered']
    #allocation6 [shape = 's32[1]{0}', space=sflag, size = 0x4, scoped, tag = 'scoped memory for scaled_product_attention.1']
    #allocation7 [shape = 'u8[20480]{0}', space=vmem, size = 0x5000, scoped, tag = 'input window, operand 2, single buffered']
    #allocation8 [shape = 'u8[8192]{0}', space=vmem, size = 0x2000, scoped, tag = 'output window, operand 0, single buffered']
    %8 = vsyncpa [#allocation3], 0
    %9 = vsyncpa [#allocation6], 0
    %10 = vsyncpa [#allocation4], 0
    // Predicated region
    $region2: #{scaled_product_attention.1} parent=1 // pred_check
      _
    $region3: #{scaled_product_attention.1} parent=1 // pred_check_branch
      %12 = sbr.rel (0) target = $region5
    $region4: #{scaled_product_attention.1} parent=1 // pred_region
      %14 = vsyncadd [#allocation3], 0
      %s15 = sshll.u32 %s0, 4
      %s16 = int_to_ptr.hbm [resolvable:$true] %s15
      %s17 = sshll.u32 [#allocation2], 4
      %s18 = int_to_ptr.vmem [resolvable:$true] %s17
      %23 = dma.hbm_to_vmem [thread:$0]  %s16, 256, %s18, [#allocation3], 128, 128, 8
    $region5: #{scaled_product_attention.1} parent=1 // pred_fallthru
      _
    // Predicated region
    $region6: #{scaled_product_attention.1} parent=1 // pred_check
      _
    $region7: #{scaled_product_attention.1} parent=1 // pred_check_branch
      %25 = sbr.rel (0) target = $region9
    $region8: #{scaled_product_attention.1} parent=1 // pred_region
      %27 = vsyncadd [#allocation6], 0
      %s28 = sshll.u32 %s1, 4
      %s29 = int_to_ptr.hbm [resolvable:$true] %s28
      %s30 = sshll.u32 [#allocation5], 4
      %s31 = int_to_ptr.vmem [resolvable:$true] %s30
      %36 = dma.hbm_to_vmem [thread:$0]  %s29, 256, %s31, [#allocation6], 128, 128, 8
    $region9: #{scaled_product_attention.1} parent=1 // pred_fallthru
      _
    // Predicated region
    $region10: #{scaled_product_attention.1} parent=1 // pred_check
      _
    $region11: #{scaled_product_attention.1} parent=1 // pred_check_branch
      %38 = sbr.rel (0) target = $region13
    $region12: #{scaled_product_attention.1} parent=1 // pred_region
      %40 = vsyncadd [#allocation6], 0
      %s41 = sshll.u32 %s2, 4
      %s42 = int_to_ptr.hbm [resolvable:$true] %s41
      %s43 = sshll.u32 [#allocation7], 4
      %s44 = int_to_ptr.vmem [resolvable:$true] %s43
      %49 = dma.hbm_to_vmem [thread:$0]  %s42, 640, %s44, [#allocation6], 128, 128, 8
    $region13: #{scaled_product_attention.1} parent=1 // pred_fallthru
      _
    // Predicated region
    $region14: #{scaled_product_attention.1} parent=1 // pred_check
      _
    $region15: #{scaled_product_attention.1} parent=1 // pred_check_branch
      %51 = sbr.rel (0) target = $region17
    $region16: #{scaled_product_attention.1} parent=1 // pred_region
      %53 = dma.done [#allocation3], 256
    $region17: #{scaled_product_attention.1} parent=1 // pred_fallthru
      _
    // Predicated region
    $region18: #{scaled_product_attention.1} parent=1 // pred_check
      _
    $region19: #{scaled_product_attention.1} parent=1 // pred_check_branch
      %55 = sbr.rel (0) target = $region21
    $region20: #{scaled_product_attention.1} parent=1 // pred_region
      %57 = dma.done [#allocation6], 256
    $region21: #{scaled_product_attention.1} parent=1 // pred_fallthru
      _
    // Predicated region
    $region22: #{scaled_product_attention.1} parent=1 // pred_check
      _
    $region23: #{scaled_product_attention.1} parent=1 // pred_check_branch
      %59 = sbr.rel (0) target = $region25
    $region24: #{scaled_product_attention.1} parent=1 // pred_region
      %61 = dma.done [#allocation6], 640
    $region25: #{scaled_product_attention.1} parent=1 // pred_fallthru
      _
    %v62 = vld [vmem:[#allocation7] sm:$0xff]
    %v63 = vld [vmem:[#allocation7 + $0x8] sm:$0xff]
    %v64 = vld [vmem:[#allocation7 + $0x10] sm:$0xff]
    %v65 = vld [vmem:[#allocation7 + $0x18] sm:$0xff]
    %v66 = vld [vmem:[#allocation7 + $0x20] sm:$0x1]
    %v67 = vld [vmem:[#allocation2] sm:$0xff]
    %v68 = vld [vmem:[#allocation2 + $0x8] sm:$0xff]
    %v69 = vld [vmem:[#allocation5] sm:$0xff]
    %v70 = vld [vmem:[#allocation5 + $0x8] sm:$0xff]
    %v71 = vperm.slane %v66, 0
    %vm72 = vcmask 261120
    %v74 = vsel %vm72, %v67, 0
    %v77 = vsel %vm72, %v68, 0
    %v80 = vsel %vm72, %v69, 0
    %v83 = vsel %vm72, %v70, 0
    %85 = vmatpush.msra.mxu0 0.0
    %86 = vmatpush.msra.mxu0 0.0
    %87 = vmatpush.msra.mxu0 0.0
    %88 = vmatpush.msra.mxu0 0.0
    %89 = vmatpush.msra.mxu0 0.0
    %90 = vmatpush.msra.mxu0 0.0
    %91 = vmatpush.msra.mxu0 0.0
    %92 = vmatpush.msra.mxu0 0.0
    %93 = vmatpush.msra.mxu0 0.0
    %94 = vmatpush.msra.mxu0 0.0
    %95 = vmatpush.msra.mxu0 0.0
    %96 = vmatpush.msra.mxu0 0.0
    %97 = vmatpush.msra.mxu0 %v65
    %98 = vmatpush.msra.mxu0 %v64
    %99 = vmatpush.msra.mxu0 %v63
    %100 = vmatpush.msra.mxu0 %v62
    %101 = vmatmul.f32.gmra.mxu0 %v74
    %v102 = vpop.f32.mrf.mxu0
    %v103 = vadd.f32 %v71, %v102
    %104 = vmatmul.f32.gmra.mxu0 %v77
    %v105 = vpop.f32.mrf.mxu0
    %v106 = vadd.f32 %v71, %v105
    %107 = vmatmul.f32.gmra.mxu0 %v80
    %v108 = vpop.f32.mrf.mxu0
    %v109 = vadd.f32 %v71, %v108
    %110 = vmatmul.f32.gmra.mxu0 %v83
    %v111 = vpop.f32.mrf.mxu0
    %v112 = vadd.f32 %v71, %v111
    %113 = vdwg.mxu0
    %116 = vrot.lane.b32.xlu0 %v103, 96
    %v117 = vpop.permute.xlu0 %116
    %118 = vrot.lane.b32.xlu0 %v106, 96
    %v119 = vpop.permute.xlu0 %118
    %122 = vrot.lane.b32.xlu0 %v109, 64
    %v123 = vpop.permute.xlu0 %122
    %124 = vrot.lane.b32.xlu0 %v112, 64
    %v125 = vpop.permute.xlu0 %124
    %v126 = vsel %vm72, %v117, 0
    %v128 = vsel %vm72, %v119, 0
    %v130 = vsel %vm72, %v123, 0
    %v132 = vsel %vm72, %v125, 0
    %134 = vmatpush.xpose.msra.mxu0 0.0
    %135 = vmatpush.xpose.msra.mxu0 0.0
    %136 = vmatpush.xpose.msra.mxu0 0.0
    %137 = vmatpush.xpose.msra.mxu0 0.0
    %138 = vmatpush.xpose.msra.mxu0 0.0
    %139 = vmatpush.xpose.msra.mxu0 0.0
    %140 = vmatpush.xpose.msra.mxu0 0.0
    %141 = vmatpush.xpose.msra.mxu0 0.0
    %142 = vmatpush.xpose.msra.mxu0 0.0
    %143 = vmatpush.xpose.msra.mxu0 0.0
    %144 = vmatpush.xpose.msra.mxu0 0.0
    %145 = vmatpush.xpose.msra.mxu0 0.0
    %146 = vmatpush.xpose.msra.mxu0 0.0
    %147 = vmatpush.xpose.msra.mxu0 0.0
    %148 = vmatpush.xpose.msra.mxu0 %v132
    %149 = vmatpush.xpose.msra.mxu0 %v130
    %150 = vmatmul.f32.gmra.mxu0 %v126
    %v151 = vpop.f32.mrf.mxu0
    %v152 = vadd.f32 0.0, %v151
    %153 = vmatmul.f32.gmra.mxu0 %v128
    %v154 = vpop.f32.mrf.mxu0
    %v155 = vadd.f32 0.0, %v154
    %156 = vdwg.mxu0
    %v157 = vlaneseq
    %v158 = vshrl.u32 %v157, 7
    %v159 = vadd.s32 %v158, 8
    %vm160 = vcmp.lt.s32.totalorder %v158, 0
    %v161 = vsub.s32 0, %v158
    %v162 = vsel %vm160, %v161, %v158
    %v163 = vshrl.u32 %v162, 1
    %v164 = vand.u32 %v162, 1
    %v165 = vsub.s32 0, %v164
    %v166 = vsel %vm160, %v165, %v164
    %vm167 = vcmp.lt.s32.totalorder %v159, 0
    %v168 = vsub.s32 0, %v159
    %v169 = vsel %vm167, %v168, %v159
    %v170 = vshrl.u32 %v169, 1
    %v171 = vand.u32 %v169, 1
    %v172 = vsub.s32 0, %v171
    %v173 = vsel %vm167, %v172, %v171
    %vm174 = vcmp.ne.s32.totalorder %v166, 0
    %vm175 = vcmp.ne.s32.totalorder %v173, 0
    %vm176 = vcmp.lt.s32.totalorder %v166, 0
    %vm177 = vcmp.lt.s32.totalorder %v173, 0
    %vm178 = vmand %vm176, %vm174
    %vm179 = vmand %vm177, %vm175
    %v180 = vadd.s32 %v166, 2
    %v181 = vadd.s32 %v173, 2
    %v182 = vsel %vm178, %v180, %v166
    %v183 = vsel %vm179, %v181, %v173
    %v184 = vlaneseq
    %v185 = vand.u32 %v184, 127
    %vm186 = vcmp.lt.s32.totalorder %v185, 0
    %v187 = vsub.s32 0, %v185
    %v188 = vsel %vm186, %v187, %v185
    %v189 = vshrl.u32 %v188, 1
    %v190 = vand.u32 %v188, 1
    %v191 = vsub.s32 0, %v190
    %v192 = vsel %vm186, %v191, %v190
    %vm193 = vcmp.ne.s32.totalorder %v192, 0
    %vm194 = vcmp.lt.s32.totalorder %v192, 0
    %vm195 = vmand %vm194, %vm193
    %v196 = vadd.s32 %v192, 2
    %v197 = vsel %vm195, %v196, %v192
    %vm198 = vcmp.eq.s32.totalorder %v182, %v197
    %vm199 = vcmp.eq.s32.totalorder %v183, %v197
    %v200 = vsel %vm198, %v152, -1e+30
    %v201 = vsel %vm199, %v155, -1e+30
    %vm202 = vcmask 130048
    %v203 = vsel %vm202, %v200, -inf
    %204 = vmax.xlane.f32.xlu0 %v203
    %v205 = vpop.xlane.xlu0 %204
    %v206 = vsel %vm202, %v201, -inf
    %207 = vmax.xlane.f32.xlu0 %v206
    %v208 = vpop.xlane.xlu0 %207
    %v209 = vsub.f32 %v200, %v205
    %v210 = vsub.f32 %v201, %v208
    %v211 = vmul.f32 %v209, 1.442695
    %v212 = vpow.pop %v211
    %v213 = vmul.f32 %v210, 1.442695
    %v214 = vpow.pop %v213
    %v215 = vsel %vm202, %v212, 0.0
    %216 = vadd.xlane.f32.xlu0 %v215
    %v217 = vpop.xlane.xlu0 %216
    %v218 = vsel %vm202, %v214, 0.0
    %219 = vadd.xlane.f32.xlu0 %v218
    %v220 = vpop.xlane.xlu0 %219
    %v221 = vrcp.pop %v217
    %v222 = vmul.f32 %v217, %v221
    %v223 = vsub.f32 1.0, %v222
    %v224 = vmul.f32 %v221, %v223
    %v225 = vadd.f32 %v221, %v224
    %vm226 = vweird.f32 %v217
    %vm227 = vweird.f32 %v221
    %vm228 = vmor %vm226, %vm227
    %v229 = vsel %vm228, %v221, %v225
    %v230 = vand.u32 2147483647, %v217
    %vm231 = vcmp.eq.f32.partialorder %v230, 8.507059e+37
    %v232 = vand.u32 %v217, 2147483648
    %v233 = vor.u32 1.1754944e-38, %v232
    %v234 = vsel %vm231, %v233, %v229
    %v235 = vmul.f32 %v212, %v234
    %v236 = vrcp.pop %v220
    %v237 = vmul.f32 %v220, %v236
    %v238 = vsub.f32 1.0, %v237
    %v239 = vmul.f32 %v236, %v238
    %v240 = vadd.f32 %v236, %v239
    %vm241 = vweird.f32 %v220
    %vm242 = vweird.f32 %v236
    %vm243 = vmor %vm241, %vm242
    %v244 = vsel %vm243, %v236, %v240
    %v245 = vand.u32 2147483647, %v220
    %vm246 = vcmp.eq.f32.partialorder %v245, 8.507059e+37
    %v247 = vand.u32 %v220, 2147483648
    %v248 = vor.u32 1.1754944e-38, %v247
    %v249 = vsel %vm246, %v248, %v244
    %v250 = vmul.f32 %v214, %v249
    %251 = vrot.lane.b32.xlu0 %v109, 32
    %v252 = vpop.permute.xlu0 %251
    %253 = vrot.lane.b32.xlu0 %v112, 32
    %v254 = vpop.permute.xlu0 %253
    %v258 = vsel %vm202, %v235, 0
    %v261 = vsel %vm202, %v250, 0
    %263 = vmatpush.msra.mxu0 0.0
    %264 = vmatpush.msra.mxu0 0.0
    %265 = vmatpush.msra.mxu0 0.0
    %266 = vmatpush.msra.mxu0 0.0
    %267 = vmatpush.msra.mxu0 0.0
    %268 = vmatpush.msra.mxu0 0.0
    %269 = vmatpush.msra.mxu0 0.0
    %270 = vmatpush.msra.mxu0 0.0
    %271 = vmatpush.msra.mxu0 0.0
    %272 = vmatpush.msra.mxu0 0.0
    %273 = vmatpush.msra.mxu0 0.0
    %274 = vmatpush.msra.mxu0 0.0
    %275 = vmatpush.msra.mxu0 0.0
    %276 = vmatpush.msra.mxu0 0.0
    %277 = vmatpush.msra.mxu0 %v254
    %278 = vmatpush.msra.mxu0 %v252
    %279 = vmatmul.f32.gmra.mxu0 %v258
    %v280 = vpop.f32.mrf.mxu0
    %v281 = vadd.f32 0.0, %v280
    %282 = vmatmul.f32.gmra.mxu0 %v261
    %v283 = vpop.f32.mrf.mxu0
    %v284 = vadd.f32 0.0, %v283
    %285 = vdwg.mxu0
    %v287 = vsel %vm72, %v281, 0
    %v290 = vsel %vm72, %v284, 0
    %292 = vmatpush.msra.mxu0 0.0
    %293 = vmatpush.msra.mxu0 0.0
    %294 = vmatpush.msra.mxu0 0.0
    %295 = vmatpush.msra.mxu0 0.0
    %296 = vmatpush.msra.mxu0 0.0
    %297 = vmatpush.msra.mxu0 0.0
    %298 = vmatpush.msra.mxu0 0.0
    %299 = vmatpush.msra.mxu0 0.0
    %300 = vmatpush.msra.mxu0 0.0
    %301 = vmatpush.msra.mxu0 0.0
    %302 = vmatpush.msra.mxu0 0.0
    %303 = vmatpush.msra.mxu0 0.0
    %304 = vmatpush.msra.mxu0 %v65
    %305 = vmatpush.msra.mxu0 %v64
    %306 = vmatpush.msra.mxu0 %v63
    %307 = vmatpush.msra.mxu0 %v62
    %308 = vmatmul.f32.gmra.mxu0 %v287
    %v309 = vpop.f32.mrf.mxu0
    %v310 = vadd.f32 %v71, %v309
    %311 = vmatmul.f32.gmra.mxu0 %v290
    %v312 = vpop.f32.mrf.mxu0
    %v313 = vadd.f32 %v71, %v312
    %314 = vdwg.mxu0
    %315 = vst.msk [vmem:[#allocation8] sm:$0xff] %vm72, %v310
    %316 = vst.msk [vmem:[#allocation8 + $0x8] sm:$0xff] %vm72, %v313
    // Predicated region
    $region26: #{scaled_product_attention.1} parent=1 // pred_check
      _
    $region27: #{scaled_product_attention.1} parent=1 // pred_check_branch
      %318 = sbr.rel (0) target = $region29
    $region28: #{scaled_product_attention.1} parent=1 // pred_region
      %320 = vsyncadd [#allocation4], 0
      %s321 = sshll.u32 [#allocation8], 4
      %s322 = int_to_ptr.vmem [resolvable:$true] %s321
      %s323 = sshll.u32 %s3, 4
      %s324 = int_to_ptr.hbm [resolvable:$true] %s323
      %329 = dma.vmem_to_hbm [thread:$0]  %s322, 256, %s324, [#allocation4], 128, 128, 8
    $region29: #{scaled_product_attention.1} parent=1 // pred_fallthru
      _
    // Predicated region
    $region30: #{scaled_product_attention.1} parent=1 // pred_check
      _
    $region31: #{scaled_product_attention.1} parent=1 // pred_check_branch
      %331 = sbr.rel (0) target = $region33
    $region32: #{scaled_product_attention.1} parent=1 // pred_region
      %333 = dma.done [#allocation4], 256
    $region33: #{scaled_product_attention.1} parent=1 // pred_fallthru
      _
    %334 = vsyncpa [#allocation3], 1
    %335 = vsyncpa [#allocation6], 1
    %336 = vsyncpa [#allocation4], 1

</llo_original>
